<compile_context>
chip_gen: v7x
topology: tpu7x:2x2x1
jax: 0.10.0
libtpu: 0.0.40
codegen_flags: <defaults>
</compile_context>

<pallas_src>
import functools

import jax
import jax.numpy as jnp
from jax.experimental import pallas as pl
from jax.experimental.pallas import tpu as pltpu


_TARGET_BLOCK_BYTES = 8 << 20     # ~8 MiB per streamed attn block (x2 double-buffered)
_VMEM_LIMIT_CAP = 48 << 20        # stay well inside v7x's 64 MiB physical per-TC VMEM


def _choose_tiles(B, S, T, itemsize):
    """Pick (batch_block, s_tile). T stays full (lane-dense, contiguous DMA)."""
    sub = max(8, 32 // itemsize)              # sublane multiple: f32->8, bf16->16, int8->32
    row_bytes = S * T * itemsize              # one full batch row
    if row_bytes > _TARGET_BLOCK_BYTES and S > sub:
        # One batch row per block is already big: tile along S, keep T contiguous.
        b_blk = 1
        s_tile = (_TARGET_BLOCK_BYTES // (T * itemsize)) // sub * sub
        s_tile = max(sub, s_tile)
        s_tile = min(s_tile, S)               # == S means "full extent" (always valid)
    else:
        # Fuse batch rows until we hit the block budget.
        s_tile = S
        b_blk = max(1, min(B, _TARGET_BLOCK_BYTES // max(1, row_bytes)))
    if B >= 2:
        # Keep >= 2 steps on the "parallel" batch axis so v7x's 2 TCs both get work.
        b_blk = min(b_blk, pl.cdiv(B, 2))
    return int(b_blk), int(s_tile)


def _guided_attn_kernel(src_ref, tgt_ref, attn_ref, sum_ref, *, neg_inv_two_sigma_sq):
    # src_ref, tgt_ref: (Bb, 1, 1) int32 VMEM blocks holding the per-batch lengths.
    # attn_ref:         (Bb, Ss, T) native-dtype VMEM block of attention weights.
    # sum_ref:          (Bb, 1, 1) f32 output block; resident across the S (reduction) axis.
    Bb, Ss, T = attn_ref.shape
    sj = pl.program_id(1)
    s0 = sj * Ss                                          # global S offset of this tile

    s_len = src_ref[...]                                  # (Bb, 1, 1) int32
    t_len = tgt_ref[...]                                  # (Bb, 1, 1) int32
    inv_s = 1.0 / s_len.astype(jnp.float32)               # tiny vectors; exact divide once
    inv_t = 1.0 / t_len.astype(jnp.float32)

    # 1-D index math, hoisted out of the (Ss, T) plane.
    s_idx = jax.lax.broadcasted_iota(jnp.int32, (1, Ss, 1), 1) + s0
    t_idx = jax.lax.broadcasted_iota(jnp.int32, (1, 1, T), 2)
    s_frac = s_idx.astype(jnp.float32) * inv_s            # (Bb, Ss, 1)
    t_frac = t_idx.astype(jnp.float32) * inv_t            # (Bb, 1, T)

    diff = s_frac - t_frac                                # (Bb, Ss, T) broadcast subtract
    w = 1.0 - jnp.exp(diff * diff * neg_inv_two_sigma_sq)

    # Broadcast 1-D masks; jnp.where also keeps garbage in padded regions out of the sum
    # (both the ragged valid-length tails and any S/T block padding past the array edge).
    mask = (s_idx < s_len) & (t_idx < t_len)              # (Bb, Ss, T)
    prod = jnp.where(mask, w * attn_ref[...].astype(jnp.float32), 0.0)
    partial = jnp.sum(prod, axis=(1, 2), keepdims=True)   # (Bb, 1, 1)

    @pl.when(sj == 0)
    def _():
        sum_ref[...] = jnp.zeros_like(sum_ref)

    sum_ref[...] += partial


def guided_attention_loss(attn, src_lens, tgt_lens, sigma, reduction="mean",
                          b_blk=None, s_tile=None):
    """attn: (B, max_src_len, max_tgt_len); src_lens/tgt_lens: (B,) int."""
    B, S, T = attn.shape
    itemsize = attn.dtype.itemsize
    src_i = src_lens.astype(jnp.int32).reshape(B, 1, 1)
    tgt_i = tgt_lens.astype(jnp.int32).reshape(B, 1, 1)

    auto_b, auto_s = _choose_tiles(B, S, T, itemsize)
    b_blk = auto_b if b_blk is None else int(b_blk)
    s_tile = auto_s if s_tile is None else int(s_tile)
    num_b = pl.cdiv(B, b_blk)
    num_s = pl.cdiv(S, s_tile)

    # VMEM budget: 2x double-buffered attn blocks + small lens/output blocks + margin.
    block_bytes = b_blk * s_tile * T * itemsize
    vmem_limit = int(min(max(2 * block_bytes + (4 << 20), 16 << 20), _VMEM_LIMIT_CAP))

    kernel = functools.partial(
        _guided_attn_kernel,
        neg_inv_two_sigma_sq=-1.0 / (2.0 * float(sigma) ** 2))

    sums = pl.pallas_call(
        kernel,
        out_shape=jax.ShapeDtypeStruct((B, 1, 1), jnp.float32),
        grid=(num_b, num_s),
        in_specs=[
            pl.BlockSpec((b_blk, 1, 1), lambda b, sj: (b, 0, 0)),
            pl.BlockSpec((b_blk, 1, 1), lambda b, sj: (b, 0, 0)),
            pl.BlockSpec((b_blk, s_tile, T), lambda b, sj: (b, sj, 0)),
        ],
        out_specs=pl.BlockSpec((b_blk, 1, 1), lambda b, sj: (b, 0, 0)),
        compiler_params=pltpu.CompilerParams(
            dimension_semantics=("parallel", "arbitrary"),
            vmem_limit_bytes=vmem_limit),
    )(src_i, tgt_i, attn)

    total = jnp.sum(sums)
    if reduction == "sum":
        return total
    # masked_select().mean() == sum / #selected, with #selected = sum(src_len * tgt_len).
    # Computed in f32 so long sequences can't overflow an int32 product.
    # NOTE: all-zero lengths -> divide-by-zero NaN, same as the PyTorch module.
    count = jnp.sum(src_lens.astype(jnp.float32) * tgt_lens.astype(jnp.float32))
    return total / count


def _reference_loss(attn, src_lens, tgt_lens, sigma, reduction="mean"):
    # Pure-JAX reference mirroring the PyTorch forward.
    attn = attn.astype(jnp.float32)
    B, S, T = attn.shape
    s_idx = jnp.arange(S)[None, :, None]
    t_idx = jnp.arange(T)[None, None, :]
    s_len = src_lens[:, None, None].astype(jnp.float32)
    t_len = tgt_lens[:, None, None].astype(jnp.float32)
    diff = s_idx / s_len - t_idx / t_len
    w = 1.0 - jnp.exp(-(diff * diff) / (2.0 * sigma * sigma))
    mask = (s_idx < src_lens[:, None, None]) & (t_idx < tgt_lens[:, None, None])
    prod = jnp.where(mask, w * attn, 0.0)
    total = jnp.sum(prod)
    if reduction == "sum":
        return total
    return total / jnp.sum(mask.astype(jnp.float32))


if __name__ == "__main__":
    key = jax.random.PRNGKey(0)
    sigma = 0.4                  # module __init__ parameter, set deterministically

    # --- Test 1: small shapes, f32 attn, default (auto) tiling --------------------------
    B, S, T = 2, 8, 16           # batch, max src (text) len, max tgt (mel) len
    k1, k2, k3 = jax.random.split(key, 3)
    attn = jax.nn.softmax(jax.random.normal(k1, (B, S, T), dtype=jnp.float32), axis=1)
    src_lens = jnp.array([8, 5], dtype=jnp.int32)
    tgt_lens = jnp.array([16, 10], dtype=jnp.int32)

    loss = jax.block_until_ready(
        guided_attention_loss(attn, src_lens, tgt_lens, sigma, reduction="mean"))
    ref = _reference_loss(attn, src_lens, tgt_lens, sigma, reduction="mean")
    assert jnp.allclose(loss, ref, rtol=1e-5, atol=1e-5), (loss, ref)

    loss_sum = jax.block_until_ready(
        guided_attention_loss(attn, src_lens, tgt_lens, sigma, reduction="sum"))
    ref_sum = _reference_loss(attn, src_lens, tgt_lens, sigma, reduction="sum")
    assert jnp.allclose(loss_sum, ref_sum, rtol=1e-5, atol=1e-5), (loss_sum, ref_sum)

    # bf16-on-the-wire: native dtype goes straight to the kernel, cast happens in-kernel.
    attn_bf = attn.astype(jnp.bfloat16)
    loss_bf = jax.block_until_ready(
        guided_attention_loss(attn_bf, src_lens, tgt_lens, sigma, reduction="mean"))
    ref_bf = _reference_loss(attn_bf.astype(jnp.float32), src_lens, tgt_lens, sigma, "mean")
    assert jnp.allclose(loss_bf, ref_bf, rtol=1e-5, atol=1e-5), (loss_bf, ref_bf)

    # --- Test 2: exercise the S-tiled accumulation path (ragged S tail, full-T blocks) --
    B2, S2, T2 = 3, 20, 256
    attn2 = jax.nn.softmax(jax.random.normal(k2, (B2, S2, T2), dtype=jnp.float32), axis=1)
    src_lens2 = jnp.array([20, 9, 3], dtype=jnp.int32)
    tgt_lens2 = jnp.array([256, 100, 7], dtype=jnp.int32)

    loss2 = jax.block_until_ready(
        guided_attention_loss(attn2, src_lens2, tgt_lens2, sigma, reduction="mean",
                              b_blk=1, s_tile=8))
    ref2 = _reference_loss(attn2, src_lens2, tgt_lens2, sigma, reduction="mean")
    assert jnp.allclose(loss2, ref2, rtol=1e-4, atol=1e-5), (loss2, ref2)

    loss2_sum = jax.block_until_ready(
        guided_attention_loss(attn2, src_lens2, tgt_lens2, sigma, reduction="sum",
                              b_blk=1, s_tile=8))
    ref2_sum = _reference_loss(attn2, src_lens2, tgt_lens2, sigma, reduction="sum")
    assert jnp.allclose(loss2_sum, ref2_sum, rtol=1e-4, atol=1e-5), (loss2_sum, ref2_sum)

    # --- Test 3: exercise multi-row batch fusion with >=2 parallel grid steps -----------
    B3, S3, T3 = 5, 16, 128
    attn3 = jax.nn.softmax(jax.random.normal(k3, (B3, S3, T3), dtype=jnp.float32), axis=1)
    src_lens3 = jnp.array([16, 12, 7, 16, 1], dtype=jnp.int32)
    tgt_lens3 = jnp.array([128, 64, 33, 128, 5], dtype=jnp.int32)

    loss3 = jax.block_until_ready(
        guided_attention_loss(attn3, src_lens3, tgt_lens3, sigma, reduction="mean",
                              b_blk=2, s_tile=S3))
    ref3 = _reference_loss(attn3, src_lens3, tgt_lens3, sigma, reduction="mean")
    assert jnp.allclose(loss3, ref3, rtol=1e-4, atol=1e-5), (loss3, ref3)

    print("KERNEL_OK")
</pallas_src>

<mosaic_0001>
module attributes {stable_mosaic.version = 11 : i64} {
  func.func @_guided_attn_kernel(%arg0: i32, %arg1: i32, %arg2: memref<1x1x1xi32, #tpu.memory_space<vmem>>, %arg3: memref<1x1x1xi32, #tpu.memory_space<vmem>>, %arg4: memref<1x8x16xf32, #tpu.memory_space<vmem>>, %arg5: memref<1x1x1xf32, #tpu.memory_space<vmem>>) attributes {dimension_semantics = [#tpu.dimension_semantics<parallel>, #tpu.dimension_semantics<arbitrary>], iteration_bounds = array<i64: 2, 1>, scalar_prefetch = 0 : i64, scratch_operands = 0 : i64, tpu.core_type = #tpu.core_type<tc>, window_params = [{transform_indices = @transform_0, window_bounds = array<i64: 1, 1, 1>}, {transform_indices = @transform_1, window_bounds = array<i64: 1, 1, 1>}, {transform_indices = @transform_2, window_bounds = array<i64: 1, 8, 16>}, {transform_indices = @transform_3, window_bounds = array<i64: 1, 1, 1>}]} {
    %c8_i32 = arith.constant 8 : i32
    %0 = arith.muli %arg1, %c8_i32 : i32
    %c0 = arith.constant 0 : index
    %c0_0 = arith.constant 0 : index
    %c0_1 = arith.constant 0 : index
    %1 = vector.load %arg2[%c0, %c0_0, %c0_1] : memref<1x1x1xi32, #tpu.memory_space<vmem>>, vector<1x1x1xi32>
    %c0_2 = arith.constant 0 : index
    %c0_3 = arith.constant 0 : index
    %c0_4 = arith.constant 0 : index
    %2 = vector.load %arg3[%c0_2, %c0_3, %c0_4] : memref<1x1x1xi32, #tpu.memory_space<vmem>>, vector<1x1x1xi32>
    %3 = arith.sitofp %1 : vector<1x1x1xi32> to vector<1x1x1xf32>
    %cst = arith.constant 1.000000e+00 : f32
    %4 = vector.broadcast %cst : f32 to vector<1x1x1xf32>
    %5 = arith.divf %4, %3 : vector<1x1x1xf32>
    %6 = arith.sitofp %2 : vector<1x1x1xi32> to vector<1x1x1xf32>
    %cst_5 = arith.constant 1.000000e+00 : f32
    %7 = vector.broadcast %cst_5 : f32 to vector<1x1x1xf32>
    %8 = arith.divf %7, %6 : vector<1x1x1xf32>
    %9 = tpu.iota {dimensions = array<i32: 1>} : vector<1x8x1xi32>
    %10 = vector.broadcast %0 : i32 to vector<1x8x1xi32>
    %11 = arith.addi %9, %10 : vector<1x8x1xi32>
    %12 = tpu.iota {dimensions = array<i32: 2>} : vector<1x1x16xi32>
    %13 = arith.sitofp %11 : vector<1x8x1xi32> to vector<1x8x1xf32>
    %14 = vector.broadcast %5 : vector<1x1x1xf32> to vector<1x8x1xf32>
    %15 = arith.mulf %13, %14 : vector<1x8x1xf32>
    %16 = arith.sitofp %12 : vector<1x1x16xi32> to vector<1x1x16xf32>
    %17 = vector.broadcast %8 : vector<1x1x1xf32> to vector<1x1x16xf32>
    %18 = arith.mulf %16, %17 : vector<1x1x16xf32>
    %19 = vector.broadcast %15 : vector<1x8x1xf32> to vector<1x8x16xf32>
    %20 = vector.broadcast %18 : vector<1x1x16xf32> to vector<1x8x16xf32>
    %21 = arith.subf %19, %20 : vector<1x8x16xf32>
    %22 = arith.mulf %21, %21 : vector<1x8x16xf32>
    %cst_6 = arith.constant -3.125000e+00 : f32
    %23 = vector.broadcast %cst_6 : f32 to vector<1x8x16xf32>
    %24 = arith.mulf %22, %23 : vector<1x8x16xf32>
    %25 = math.exp %24 : vector<1x8x16xf32>
    %cst_7 = arith.constant 1.000000e+00 : f32
    %26 = vector.broadcast %cst_7 : f32 to vector<1x8x16xf32>
    %27 = arith.subf %26, %25 : vector<1x8x16xf32>
    %28 = vector.broadcast %1 : vector<1x1x1xi32> to vector<1x8x1xi32>
    %29 = arith.cmpi slt, %11, %28 : vector<1x8x1xi32>
    %30 = vector.broadcast %2 : vector<1x1x1xi32> to vector<1x1x16xi32>
    %31 = arith.cmpi slt, %12, %30 : vector<1x1x16xi32>
    %32 = vector.broadcast %29 : vector<1x8x1xi1> to vector<1x8x16xi1>
    %33 = vector.broadcast %31 : vector<1x1x16xi1> to vector<1x8x16xi1>
    %34 = arith.andi %32, %33 : vector<1x8x16xi1>
    %c0_8 = arith.constant 0 : index
    %c0_9 = arith.constant 0 : index
    %c0_10 = arith.constant 0 : index
    %35 = vector.load %arg4[%c0_8, %c0_9, %c0_10] : memref<1x8x16xf32, #tpu.memory_space<vmem>>, vector<1x8x16xf32>
    %36 = arith.mulf %27, %35 : vector<1x8x16xf32>
    %cst_11 = arith.constant 0.000000e+00 : f32
    %37 = vector.broadcast %cst_11 : f32 to vector<1x8x16xf32>
    %38 = arith.select %34, %36, %37 : vector<1x8x16xi1>, vector<1x8x16xf32>
    %cst_12 = arith.constant dense<0.000000e+00> : vector<1xf32>
    %39 = vector.multi_reduction <add>, %38, %cst_12 [1, 2] : vector<1x8x16xf32> to vector<1xf32>
    %40 = vector.shape_cast %39 : vector<1xf32> to vector<1x1x1xf32>
    %c0_i32 = arith.constant 0 : i32
    %41 = arith.cmpi eq, %arg1, %c0_i32 : i32
    %42 = arith.extui %41 : i1 to i32
    %c0_i32_13 = arith.constant 0 : i32
    %43 = arith.cmpi ne, %42, %c0_i32_13 : i32
    scf.if %43 {
      %cst_20 = arith.constant 0.000000e+00 : f32
      %47 = vector.broadcast %cst_20 : f32 to vector<1x1x1xf32>
      %c0_21 = arith.constant 0 : index
      %c0_22 = arith.constant 0 : index
      %c0_23 = arith.constant 0 : index
      %48 = vector.load %arg5[%c0_21, %c0_22, %c0_23] : memref<1x1x1xf32, #tpu.memory_space<vmem>>, vector<1x1x1xf32>
      tpu.vector_store %arg5[%c0_21, %c0_22, %c0_23], %47 {strides = array<i32>} : memref<1x1x1xf32, #tpu.memory_space<vmem>>, vector<1x1x1xf32>,
    } else {
    }
    %c0_14 = arith.constant 0 : index
    %c0_15 = arith.constant 0 : index
    %c0_16 = arith.constant 0 : index
    %44 = vector.load %arg5[%c0_14, %c0_15, %c0_16] : memref<1x1x1xf32, #tpu.memory_space<vmem>>, vector<1x1x1xf32>
    %45 = arith.addf %44, %40 : vector<1x1x1xf32>
    %c0_17 = arith.constant 0 : index
    %c0_18 = arith.constant 0 : index
    %c0_19 = arith.constant 0 : index
    %46 = vector.load %arg5[%c0_17, %c0_18, %c0_19] : memref<1x1x1xf32, #tpu.memory_space<vmem>>, vector<1x1x1xf32>
    tpu.vector_store %arg5[%c0_17, %c0_18, %c0_19], %45 {strides = array<i32>} : memref<1x1x1xf32, #tpu.memory_space<vmem>>, vector<1x1x1xf32>,
    return
  }
  func.func @transform_0(%arg0: i32, %arg1: i32) -> (i32, i32, i32) {
    %c0_i32 = arith.constant 0 : i32
    %c0_i32_0 = arith.constant 0 : i32
    %c0_i32_1 = arith.constant 0 : i32
    return %arg0, %c0_i32, %c0_i32_0 : i32, i32, i32
  }
  func.func @transform_1(%arg0: i32, %arg1: i32) -> (i32, i32, i32) {
    %c0_i32 = arith.constant 0 : i32
    %c0_i32_0 = arith.constant 0 : i32
    %c0_i32_1 = arith.constant 0 : i32
    return %arg0, %c0_i32, %c0_i32_0 : i32, i32, i32
  }
  func.func @transform_2(%arg0: i32, %arg1: i32) -> (i32, i32, i32) {
    %c0_i32 = arith.constant 0 : i32
    %c0_i32_0 = arith.constant 0 : i32
    return %arg0, %arg1, %c0_i32 : i32, i32, i32
  }
  func.func @transform_3(%arg0: i32, %arg1: i32) -> (i32, i32, i32) {
    %c0_i32 = arith.constant 0 : i32
    %c0_i32_0 = arith.constant 0 : i32
    %c0_i32_1 = arith.constant 0 : i32
    return %arg0, %c0_i32, %c0_i32_0 : i32, i32, i32
  }
}

</mosaic_0001>

<llo_original>
// kernel: tpu_custom_call.1
$region0: #{tpu_custom_call.1}
  #allocation0 [shape = 'u32[]', space=smem, size = 0x4, offset = 0x4, fixed_abs, tag = 'smem constant byte address 0x4 - core index']
  #allocation1 [shape = 'u32[144,128]{1,0:T(1,128)}', space=vmem, size = 0x12000, scoped, tag = 'internal scratch']
  %s0 = inlined_call_operand.vmem [shape: s32[2,1,1], index: 0, kind: input, shape index: {}]
  %s1 = inlined_call_operand.vmem [shape: s32[2,1,1], index: 1, kind: input, shape index: {}]
  %s2 = inlined_call_operand.hbm [shape: f32[2,8,16], index: 2, kind: input, shape index: {}]
  %s3 = inlined_call_operand.vmem [shape: f32[2,1,1], index: 3, kind: output, shape index: {}]
  %s4 = sld [smem:[#allocation0]]
  $region53: #{tpu_custom_call.1} parent=0
    _
  %s6 = ssub.s32 1, %s4
  %s7 = scalar_select 0, %s6, %s4
  $region1: #{tpu_custom_call.1} parent=0
    #allocation2 [shape = 'u8[8192]{0}', space=vmem, size = 0x2000, scoped, tag = 'input window, operand 2']
    #allocation3 [shape = 's32[2]{0}', space=sflag, size = 0x8, scoped, tag = 'scoped memory for tpu_custom_call.1']
    %8 = vsyncpa [#allocation3], 0
    %s9 = scalar_lea.sflag [#allocation3], 1
    %10 = vsyncpa %s9, 0
    loop: start=0, step=1, limit=4
    $region2: #{tpu_custom_call.1} parent=1 // loop_pre_header
      _
    $region3: #{tpu_custom_call.1} parent=1 // loop_header
      %s12 = sphi 0, %s16
      %p13 = scmp.ge.s32.totalorder %s12, 4
      %s19 = sphi 0, %s31
      %s20 = sphi 0, %s27
      %s21 = sphi 0, %s19
      %s22 = sphi 0, %s20
      %s23 = sphi 0, %s21
      %s24 = sphi 0, %s22
      %s34 = sphi 0, %s36
      %s37 = sphi 0, %s34
      %s38 = sphi 0, %s37
      %s54 = sphi 0, %s38
      %s60 = sphi 0, %s62
      %s63 = sphi 0, %s60
      %s64 = sphi 0, %s63
      %s80 = sphi 0, %s64
      %s88 = sphi 0, %s90
      %s91 = sphi 0, %s88
      %s92 = sphi 0, %s91
      %s108 = sphi 0, %s92
      %s114 = sphi 0, %s116
      %s117 = sphi 0, %s114
      %s118 = sphi 0, %s117
      %s134 = sphi 0, %s118
    $region4: #{tpu_custom_call.1} parent=1 // loop_header_branch
      %15 = sbr.rel (%p13) target = $region8
    $region5: #{tpu_custom_call.1} parent=1 // loop_body
      %s17 = ssub.s32 %s12, 1
      %s18 = ssub.s32 %s12, 2
      %s25 = sadd.s32 1, %s20
      %p26 = scmp.ge.s32.totalorder %s25, 1
      %s27 = scalar_select %p26, 0, %s25
      %s28 = sadd.s32 1, %s19
      %s29 = scalar_select %p26, %s28, %s19
      %p30 = scmp.ge.s32.totalorder %s29, 2
      %s31 = scalar_select %p30, 0, %s29
      %s32 = ssub.s32 %s19, %s31
      %p33 = scmp.eq.s32.totalorder %s32, 0
      %s35 = sadd.s32 %s34, 1
      %s36 = scalar_select %p33, %s34, %s35
      %p39 = pneg %p33
      %p40 = scmp.eq.s32.totalorder %s12, 1
      %p41 = por %p39, %p40
      %p42 = scmp.ne.s32.totalorder %s34, %s37
      %p43 = scmp.eq.s32.totalorder %s12, 0
      %p44 = por %p42, %p43
      %p45 = scmp.ne.s32.totalorder %s34, %s37
      %p46 = scmp.eq.s32.totalorder %s17, 1
      %p47 = por %p45, %p46
      %p48 = scmp.ne.s32.totalorder %s37, %s38
      %p49 = scmp.eq.s32.totalorder %s17, 0
      %p50 = por %p48, %p49
      %p51 = scmp.ne.s32.totalorder %s37, %s38
      %p52 = scmp.eq.s32.totalorder %s18, 1
      %p53 = por %p51, %p52
      %p55 = scmp.ne.s32.totalorder %s38, %s54
      %p56 = scmp.eq.s32.totalorder %s18, 0
      %p57 = por %p55, %p56
      %s58 = ssub.s32 %s19, %s31
      %p59 = scmp.eq.s32.totalorder %s58, 0
      %s61 = sadd.s32 %s60, 1
      %s62 = scalar_select %p59, %s60, %s61
      %p65 = pneg %p59
      %p66 = scmp.eq.s32.totalorder %s12, 1
      %p67 = por %p65, %p66
      %p68 = scmp.ne.s32.totalorder %s60, %s63
      %p69 = scmp.eq.s32.totalorder %s12, 0
      %p70 = por %p68, %p69
      %p71 = scmp.ne.s32.totalorder %s60, %s63
      %p72 = scmp.eq.s32.totalorder %s17, 1
      %p73 = por %p71, %p72
      %p74 = scmp.ne.s32.totalorder %s63, %s64
      %p75 = scmp.eq.s32.totalorder %s17, 0
      %p76 = por %p74, %p75
      %p77 = scmp.ne.s32.totalorder %s63, %s64
      %p78 = scmp.eq.s32.totalorder %s18, 1
      %p79 = por %p77, %p78
      %p81 = scmp.ne.s32.totalorder %s64, %s80
      %p82 = scmp.eq.s32.totalorder %s18, 0
      %p83 = por %p81, %p82
      %s84 = ssub.s32 %s19, %s31
      %s85 = ssub.s32 %s20, %s27
      %s86 = sor.u32 %s84, %s85
      %p87 = scmp.eq.s32.totalorder %s86, 0
      %s89 = sadd.s32 %s88, 1
      %s90 = scalar_select %p87, %s88, %s89
      %p93 = pneg %p87
      %p94 = scmp.eq.s32.totalorder %s12, 1
      %p95 = por %p93, %p94
      %p96 = scmp.ne.s32.totalorder %s88, %s91
      %p97 = scmp.eq.s32.totalorder %s12, 0
      %p98 = por %p96, %p97
      %p99 = scmp.ne.s32.totalorder %s88, %s91
      %p100 = scmp.eq.s32.totalorder %s17, 1
      %p101 = por %p99, %p100
      %p102 = scmp.ne.s32.totalorder %s91, %s92
      %p103 = scmp.eq.s32.totalorder %s17, 0
      %p104 = por %p102, %p103
      %p105 = scmp.ne.s32.totalorder %s91, %s92
      %p106 = scmp.eq.s32.totalorder %s18, 1
      %p107 = por %p105, %p106
      %p109 = scmp.ne.s32.totalorder %s92, %s108
      %p110 = scmp.eq.s32.totalorder %s18, 0
      %p111 = por %p109, %p110
      %s112 = ssub.s32 %s19, %s31
      %p113 = scmp.eq.s32.totalorder %s112, 0
      %s115 = sadd.s32 %s114, 1
      %s116 = scalar_select %p113, %s114, %s115
      %p119 = pneg %p113
      %p120 = scmp.eq.s32.totalorder %s12, 1
      %p121 = por %p119, %p120
      %p122 = scmp.ne.s32.totalorder %s114, %s117
      %p123 = scmp.eq.s32.totalorder %s12, 0
      %p124 = por %p122, %p123
      %p125 = scmp.ne.s32.totalorder %s114, %s117
      %p126 = scmp.eq.s32.totalorder %s17, 1
      %p127 = por %p125, %p126
      %p128 = scmp.ne.s32.totalorder %s117, %s118
      %p129 = scmp.eq.s32.totalorder %s17, 0
      %p130 = por %p128, %p129
      %p131 = scmp.ne.s32.totalorder %s117, %s118
      %p132 = scmp.eq.s32.totalorder %s18, 1
      %p133 = por %p131, %p132
      %p135 = scmp.ne.s32.totalorder %s118, %s134
      %p136 = scmp.eq.s32.totalorder %s18, 0
      %p137 = por %p135, %p136
      %p138 = scmp.le.s32.totalorder 1, %s12
      %p139 = scmp.lt.s32.totalorder %s12, 3
      %p140 = pnand %p138, %p139
      %p141 = pneg %p140
      // Predicated region
      $region9: #{tpu_custom_call.1} parent=5 // pred_check
        _
      $region10: #{tpu_custom_call.1} parent=5 // pred_check_branch
        %143 = sbr.rel (%p140) target = $region12
      $region11: #{tpu_custom_call.1} parent=5 // pred_region
        %s144 = ssub.s32 %s12, 1
      $region12: #{tpu_custom_call.1} parent=5 // pred_fallthru
        _
      %p145 = scmp.lt.s32.totalorder %s12, 2
      // Predicated region
      $region13: #{tpu_custom_call.1} parent=5 // pred_check
        %p146 = pneg %p145
      $region14: #{tpu_custom_call.1} parent=5 // pred_check_branch
        %148 = sbr.rel (%p146) target = $region16
      $region15: #{tpu_custom_call.1} parent=5 // pred_region
        // Predicated region
        $region17: #{tpu_custom_call.1} parent=15 // pred_check
          %p149 = pneg %p44
        $region18: #{tpu_custom_call.1} parent=15 // pred_check_branch
          %151 = sbr.rel (%p149) target = $region20
        $region19: #{tpu_custom_call.1} parent=15 // pred_region
          %p152 = scmp.lt.s32.totalorder %s19, 1
          %s153 = scalar_select %p152, %s19, 1
          %s154 = scalar_lea.vmem %s0, %s153
        $region20: #{tpu_custom_call.1} parent=15 // pred_fallthru
          _
        // Predicated region
        $region21: #{tpu_custom_call.1} parent=15 // pred_check
          %p155 = pneg %p70
        $region22: #{tpu_custom_call.1} parent=15 // pred_check_branch
          %157 = sbr.rel (%p155) target = $region24
        $region23: #{tpu_custom_call.1} parent=15 // pred_region
          %p158 = scmp.lt.s32.totalorder %s19, 1
          %s159 = scalar_select %p158, %s19, 1
          %s160 = scalar_lea.vmem %s1, %s159
        $region24: #{tpu_custom_call.1} parent=15 // pred_fallthru
          _
        // Predicated region
        $region25: #{tpu_custom_call.1} parent=15 // pred_check
          %p161 = pneg %p98
        $region26: #{tpu_custom_call.1} parent=15 // pred_check_branch
          %163 = sbr.rel (%p161) target = $region28
        $region27: #{tpu_custom_call.1} parent=15 // pred_region
          %s164 = sand.u32 %s88, 1
          %s165 = scalar_lea.sflag [#allocation3], %s164
          %s166 = sand.u32 %s88, 1
          %s167 = smul.addr %s166, 8
          %s168 = scalar_lea.vmem [#allocation2], %s167
          %s170 = ssub.s32 128, 128
          %171 = vsyncadd %s165, %s170
          %s172 = sadd.s32 %s20, %s19
          %s173 = smul.addr %s172, 128
          %s174 = scalar_lea.hbm %s2, %s173
          %s176 = sshll.u32 %s168, 4
          %s177 = int_to_ptr.vmem [resolvable:$true] %s176
          %179 = dma.hbm_to_vmem [thread:$0]  %s174, 128, %s177, %s165
        $region28: #{tpu_custom_call.1} parent=15 // pred_fallthru
          _
      $region16: #{tpu_custom_call.1} parent=5 // pred_fallthru
        _
      %p180 = scmp.le.s32.totalorder 1, %s12
      %p181 = scmp.lt.s32.totalorder %s12, 3
      %p182 = pnand %p180, %p181
      %p183 = pneg %p182
      // Predicated region
      $region29: #{tpu_custom_call.1} parent=5 // pred_check
        _
      $region30: #{tpu_custom_call.1} parent=5 // pred_check_branch
        %185 = sbr.rel (%p182) target = $region32
      $region31: #{tpu_custom_call.1} parent=5 // pred_region
        %s186 = ssub.s32 %s12, 1
        %s187 = sand.u32 %s91, 1
        %s188 = scalar_lea.sflag [#allocation3], %s187
        %s189 = sand.u32 %s91, 1
        %s190 = smul.addr %s189, 8
        %s191 = scalar_lea.vmem [#allocation2], %s190
        // Predicated region
        $region33: #{tpu_custom_call.1} parent=31 // pred_check
          %p192 = pneg %p104
        $region34: #{tpu_custom_call.1} parent=31 // pred_check_branch
          %194 = sbr.rel (%p192) target = $region36
        $region35: #{tpu_custom_call.1} parent=31 // pred_region
          %195 = dma.done %s188, 128
        $region36: #{tpu_custom_call.1} parent=31 // pred_fallthru
          _
        %p196 = scmp.lt.s32.totalorder %s21, 1
        %s197 = scalar_select %p196, %s21, 1
        %s198 = scalar_lea.vmem %s0, %s197
        %p199 = pneg %p50
        %p200 = pneg %p47
        %p201 = scmp.lt.s32.totalorder %s21, 1
        %s202 = scalar_select %p201, %s21, 1
        %s203 = scalar_lea.vmem %s1, %s202
        %p204 = pneg %p76
        %p205 = pneg %p73
        %s206 = sand.u32 %s91, 1
        %s207 = scalar_lea.sflag [#allocation3], %s206
        %s208 = sand.u32 %s91, 1
        %s209 = smul.addr %s208, 8
        %s210 = scalar_lea.vmem [#allocation2], %s209
        %p211 = pneg %p104
        %p212 = pneg %p101
        %p213 = pneg %p130
        %p214 = pneg %p127
        %p215 = scmp.lt.s32.totalorder %s21, 1
        %s216 = scalar_select %p215, %s21, 1
        %s217 = scalar_lea.vmem %s3, %s216
        %p218 = scmp.lt.s32.totalorder %s21, 1
        %s219 = scalar_select %p218, %s21, 1
        %s220 = scalar_lea.vmem %s0, %s219
        %p221 = scmp.lt.s32.totalorder %s21, 1
        %s222 = scalar_select %p221, %s21, 1
        %s223 = scalar_lea.vmem %s1, %s222
        %p224 = scmp.lt.s32.totalorder %s21, 1
        %s225 = scalar_select %p224, %s21, 1
        %s226 = scalar_lea.vmem %s3, %s225
        %s227 = smul.u32 %s22, 8
        %v228 = vld [vmem:[%s220] sm:$0x1]
        %v229 = vld [vmem:[%s223] sm:$0x1]
        %v230 = vcvt.s32.f32 %v228
        %v231 = vrcp.pop %v230
        %v232 = vmul.f32 1.0, %v231
        %v233 = vcvt.s32.f32 %v229
        %v234 = vrcp.pop %v233
        %v235 = vmul.f32 1.0, %v234
        %v236 = vlaneseq
        %v237 = vshrl.u32 %v236, 7
        %v238 = vstv %s227
        %v239 = vadd.s32 %v237, %v238
        %v240 = vlaneseq
        %v241 = vand.u32 %v240, 127
        %v242 = vcvt.s32.f32 %v239
        %v244 = vlaneseq
        %v245 = vshrl.u32 %v244, 7
        %v246 = vsub.s32 0, %v245
        %v247 = vrot.slane %v232, %v246
        %v249 = vmul.f32 %v242, %v247
        %v250 = vcvt.s32.f32 %v241
        %252 = vset.pattern.permute.xlu0 0
        %253 = vperm.xlu0 %252, %v235
        %v254 = vpop.permute.xlu0 %253
        %v256 = vlaneseq
        %v257 = vshrl.u32 %v256, 7
        %v258 = vsub.s32 0, %v257
        %v259 = vrot.slane %v254, %v258
        %v260 = vmul.f32 %v250, %v259
        %262 = vset.pattern.permute.xlu0 0
        %263 = vperm.xlu0 %262, %v249
        %v264 = vpop.permute.xlu0 %263
        %v266 = vsub.f32 %v264, %v260
        %v267 = vmul.f32 %v266, %v266
        %v268 = vmul.f32 %v267, -3.125
        %v269 = vmul.f32 %v268, 1.442695
        %v270 = vpow.pop %v269
        %v271 = vsub.f32 1.0, %v270
        %v272 = vlaneseq
        %v273 = vshrl.u32 %v272, 7
        %v274 = vsub.s32 0, %v273
        %v275 = vrot.slane %v228, %v274
        %vm276 = vcmp.lt.s32.totalorder %v239, %v275
        %277 = vset.pattern.permute.xlu0 0
        %278 = vperm.xlu0 %277, %v229
        %v279 = vpop.permute.xlu0 %278
        %v280 = vlaneseq
        %v281 = vshrl.u32 %v280, 7
        %v282 = vsub.s32 0, %v281
        %v283 = vrot.slane %v279, %v282
        %vm284 = vcmp.lt.s32.totalorder %v241, %v283
        %v285 = vsel %vm276, 1, 0
        %286 = vset.pattern.permute.xlu0 0
        %287 = vperm.xlu0 %286, %v285
        %v288 = vpop.permute.xlu0 %287
        %vm289 = vcmp.eq.s32.totalorder %v288, 1
        %v290 = vsel %vm284, 1, 0
        %vm291 = vcmp.eq.s32.totalorder %v290, 1
        %vm292 = vmand %vm289, %vm291
        %v293 = vld [vmem:[%s191] sm:$0xff]
        %v294 = vmul.f32 %v271, %v293
        %v295 = vsel %vm292, %v294, 0.0
        %vm296 = vcmask 130048
        %v297 = vsel %vm296, %v295, 0.0
        %298 = vadd.xlane.f32.xlu0 %v297
        %v299 = vpop.xlane.xlu0 %298
        %v300 = vrot.slane %v299, 4
        %v301 = vadd.f32 %v299, %v300
        %v302 = vrot.slane %v301, 2
        %v303 = vadd.f32 %v301, %v302
        %v304 = vrot.slane %v303, 1
        %v305 = vadd.f32 %v303, %v304
        %p306 = scmp.eq.s32.totalorder %s22, 0
        // Predicated region
        $region37: #{tpu_custom_call.1} parent=31 // pred_check
          %p307 = pneg %p306
        $region38: #{tpu_custom_call.1} parent=31 // pred_check_branch
          %309 = sbr.rel (%p307) target = $region40
        $region39: #{tpu_custom_call.1} parent=31 // pred_region
          %vm310 = vcmask 0
          %311 = vst.msk [vmem:[%s226] sm:$0x1] %vm310, 0.0
        $region40: #{tpu_custom_call.1} parent=31 // pred_fallthru
          _
        %v312 = vld [vmem:[%s226] sm:$0x1]
        %v313 = vadd.f32 %v312, %v305
        %vm314 = vcmask 0
        %315 = vst.msk [vmem:[%s226] sm:$0x1] %vm314, %v313
        %p316 = scmp.lt.s32.totalorder %s21, 1
        %s317 = scalar_select %p316, %s21, 1
        %s318 = scalar_lea.vmem %s3, %s317
        // Predicated region
        $region41: #{tpu_custom_call.1} parent=31 // pred_check
          %p319 = pneg %p127
        $region42: #{tpu_custom_call.1} parent=31 // pred_check_branch
          %321 = sbr.rel (%p319) target = $region44
        $region43: #{tpu_custom_call.1} parent=31 // pred_region
          _
        $region44: #{tpu_custom_call.1} parent=31 // pred_fallthru
          _
      $region32: #{tpu_custom_call.1} parent=5 // pred_fallthru
        _
      %p322 = scmp.le.s32.totalorder 2, %s12
      // Predicated region
      $region45: #{tpu_custom_call.1} parent=5 // pred_check
        %p323 = pneg %p322
      $region46: #{tpu_custom_call.1} parent=5 // pred_check_branch
        %325 = sbr.rel (%p323) target = $region48
      $region47: #{tpu_custom_call.1} parent=5 // pred_region
        %s326 = ssub.s32 %s12, 2
        // Predicated region
        $region49: #{tpu_custom_call.1} parent=47 // pred_check
          %p327 = pneg %p133
        $region50: #{tpu_custom_call.1} parent=47 // pred_check_branch
          %329 = sbr.rel (%p327) target = $region52
        $region51: #{tpu_custom_call.1} parent=47 // pred_region
          %p330 = scmp.lt.s32.totalorder %s23, 1
          %s331 = scalar_select %p330, %s23, 1
          %s332 = scalar_lea.vmem %s3, %s331
        $region52: #{tpu_custom_call.1} parent=47 // pred_fallthru
          _
      $region48: #{tpu_custom_call.1} parent=5 // pred_fallthru
        _
    $region6: #{tpu_custom_call.1} parent=1 // loop_footer
      %s16 = sadd.s32 1, %s12
    $region7: #{tpu_custom_call.1} parent=1 // loop_footer_branch
      %11 = sbr.rel target = $region3
    $region8: #{tpu_custom_call.1} parent=1 // loop_exit
      _
    %333 = vsyncpa [#allocation3], 1
    %s334 = scalar_lea.sflag [#allocation3], 1
    %335 = vsyncpa %s334, 1

</llo_original>
